<compile_context>
chip_gen: v5e
topology: v5e:2x2
jax: 0.10.0
libtpu: 0.0.40
codegen_flags: <defaults>
</compile_context>

<pallas_src>
import numpy as np
import jax
import jax.numpy as jnp
from jax.experimental import pallas as pl
from jax.experimental.pallas import tpu as pltpu

_NEG_BIG = -1e30  # fill value for masked class columns (exp underflows to 0)


def _cdiv(a: int, b: int) -> int:
    return -(-a // b)


def _round_up(x: int, m: int) -> int:
    return (x + m - 1) // m * m


def _vmem_limit_bytes() -> int:
    """Generation-aware scoped-VMEM request (half physical, capped at 96 MiB)."""
    try:
        cap = int(pltpu.get_tpu_info().vmem_capacity_bytes)
    except Exception:  # older jax / query unavailable -> conservative default
        cap = 64 * 1024 * 1024
    return int(min(cap // 2, 96 * 1024 * 1024))


def _default_tiles(itemsize: int, vmem_limit: int) -> tuple:
    """Pick (max_tm, max_tk): double-buffered logit tiles use ~60% of the limit."""
    max_tk = 4096
    max_tm = int(0.6 * vmem_limit) // (2 * max_tk * itemsize)
    max_tm = max(64, min(1024, (max_tm // 8) * 8))
    return max_tm, max_tk


# ----------------------------------------------------------------------------
# Pallas kernel: online-logsumexp cross entropy over row/class tiles.
#   grid = (num_row_tiles, num_class_tiles), class axis last (reduction).
# ----------------------------------------------------------------------------
def _make_ce_kernel(n_rows: int, n_cols: int, row_tile: int, col_tile: int,
                    mask_cols: bool):
    def kernel(label_ref, picked_ref, logit_ref, sum_ref, cnt_ref, m_scr, s_scr):
        i = pl.program_id(0)
        k = pl.program_id(1)
        nk = pl.num_programs(1)

        @pl.when(k == 0)
        def _init():
            m_scr[...] = jnp.full(m_scr.shape, -jnp.inf, dtype=jnp.float32)
            s_scr[...] = jnp.zeros(s_scr.shape, dtype=jnp.float32)

        x = logit_ref[...].astype(jnp.float32)          # (tm, tk); bf16 inputs OK
        if mask_cols:
            # Only emitted when C % tk != 0: the last class tile reads past C
            # (no wrapper-side pad); mask those lanes to -1e30.
            limit = jnp.minimum(n_cols - k * col_tile, col_tile)
            col = jax.lax.broadcasted_iota(jnp.int32, x.shape, 1)
            x = jnp.where(col < limit, x, _NEG_BIG)

        # --- online logsumexp (running max + rescaled running sum) ---
        m_prev = m_scr[...]                                          # (tm, 1)
        m_new = jnp.maximum(m_prev, jnp.max(x, axis=-1, keepdims=True))
        s_scr[...] = (s_scr[...] * jnp.exp(m_prev - m_new)
                      + jnp.sum(jnp.exp(x - m_new), axis=-1, keepdims=True))
        m_scr[...] = m_new

        @pl.when(k == nk - 1)
        def _finalize():
            lse = m_scr[...] + jnp.log(s_scr[...])                   # (tm, 1)
            row = (jax.lax.broadcasted_iota(jnp.int32, lse.shape, 0)
                   + i * row_tile)
            # TODO(synk): PyTorch's default ignore_index is exactly -100; any
            # negative label (and ragged-row padding) is treated as ignored.
            valid = (label_ref[...] >= 0) & (row < n_rows)
            per_row = jnp.where(valid, lse - picked_ref[...], 0.0)   # (tm, 1)
            tile_sum = jnp.sum(per_row, keepdims=True)               # (1, 1)
            tile_cnt = jnp.sum(valid.astype(jnp.float32), keepdims=True)
            # lane-dense (8,128) partials per row tile (tiny unmasked writeback)
            sum_ref[...] = jnp.broadcast_to(tile_sum, sum_ref.shape)
            cnt_ref[...] = jnp.broadcast_to(tile_cnt, cnt_ref.shape)

    return kernel


def cross_entropy_pallas(logits: jax.Array, labels: jax.Array,
                         *, max_tm=None, max_tk=None) -> jax.Array:
    """F.cross_entropy(logits, labels) (mean reduction, negative labels ignored)."""
    n, c = logits.shape
    itemsize = jnp.dtype(logits.dtype).itemsize
    vmem_limit = _vmem_limit_bytes()
    d_tm, d_tk = _default_tiles(itemsize, vmem_limit)
    max_tm = d_tm if max_tm is None else max(8, (max_tm // 8) * 8)
    max_tk = d_tk if max_tk is None else max(128, (max_tk // 128) * 128)

    # ---- class tiling (lane axis): single full-dim tile when it fits ----
    if c <= max_tk:
        tk = c            # block == full class dim: no pad, no in-kernel mask
    else:
        tk = max_tk       # multiple of 128; ragged tail masked in-kernel
    nk = _cdiv(c, tk)
    mask_cols = (c % tk) != 0

    # ---- row tiling (sublane axis): >=2 tiles so v7x's two TCs both work ----
    n8 = _round_up(n, 8)
    if n <= max_tm:
        tm = _round_up(_cdiv(n8, 2), 8) if n8 >= 16 else n
    else:
        tm = max_tm
    nrt = _cdiv(n, tm)

    # Picked label logit: one tiny XLA gather hoisted out of the hot loop.
    # TODO(synk): PyTorch asserts on label >= C; here the label is clamped for
    # the gather and the (invalid) row still contributes to the mean.
    labels_i32 = labels.astype(jnp.int32)
    safe = jnp.clip(labels_i32, 0, c - 1)[:, None]
    picked = jnp.take_along_axis(logits, safe, axis=-1).astype(jnp.float32)

    kernel = _make_ce_kernel(n, c, tm, tk, mask_cols)

    out_sum, out_cnt = pl.pallas_call(
        kernel,
        out_shape=(jax.ShapeDtypeStruct((nrt * 8, 128), jnp.float32),
                   jax.ShapeDtypeStruct((nrt * 8, 128), jnp.float32)),
        grid_spec=pltpu.PrefetchScalarGridSpec(
            num_scalar_prefetch=0,
            grid=(nrt, nk),
            in_specs=[
                pl.BlockSpec((tm, 1), lambda i, k: (i, 0)),    # labels
                pl.BlockSpec((tm, 1), lambda i, k: (i, 0)),    # picked logit
                pl.BlockSpec((tm, tk), lambda i, k: (i, k)),   # logits (streamed)
            ],
            out_specs=[
                pl.BlockSpec((8, 128), lambda i, k: (i, 0)),   # per-tile loss sum
                pl.BlockSpec((8, 128), lambda i, k: (i, 0)),   # per-tile count
            ],
            scratch_shapes=[pltpu.VMEM((tm, 1), jnp.float32)] * 2,  # m, s
        ),
        compiler_params=pltpu.CompilerParams(
            dimension_semantics=("parallel", "arbitrary"),
            vmem_limit_bytes=vmem_limit,
        ),
    )(labels_i32[:, None], picked, logits)

    loss_sum = jnp.sum(out_sum.reshape(nrt, 8, 128)[:, 0, 0])
    n_valid = jnp.sum(out_cnt.reshape(nrt, 8, 128)[:, 0, 0])
    return loss_sum / n_valid


# ----------------------------------------------------------------------------
# ComposeLoss: parses "w*type + w*type", sums weighted losses, keeps a log.
# ----------------------------------------------------------------------------
class ComposeLoss:
    def __init__(self, loss_spec: str = "1.0*ce"):
        self.losses = []
        for item in loss_spec.split("+"):
            loss_weight, loss_type = item.split("*")
            loss_weight = float(loss_weight)
            if loss_type == "ce":
                loss_func = cross_entropy_pallas
            elif loss_type == "mask":
                # TODO(synk): MaskLoss.__call__ returns None in the reference
                # module (only reads `meta`); no tensor semantics to implement.
                raise NotImplementedError("mask loss has no tensor semantics")
            else:
                raise NotImplementedError()
            self.losses.append({"weight": loss_weight, "type": loss_type,
                                "func": loss_func})
        self.log = np.zeros((0, len(self.losses) + 1))

    def __call__(self, **kargs):
        terms = []
        for item in self.losses:
            t = item["weight"] * item["func"](kargs["logit"], kargs["label"])
            terms.append(t)
        loss = terms[0]
        for t in terms[1:]:
            loss = loss + t
        # single device->host fetch for logging (not one blocking sync per term)
        vals = np.asarray(jax.device_get(jnp.stack(terms + [loss])))
        self.log = np.concatenate([self.log, vals.reshape(1, -1)])
        return loss

    def print_log(self):
        for i, item in enumerate(self.losses):
            print("Loss: [{}: {:.4f}]".format(item["type"],
                                              float(np.mean(self.log[:, i]))), end=" ")
        print("[total: {:.4f}]".format(float(np.mean(self.log[:, -1]))))

    def clear(self):
        self.log = np.zeros((0, len(self.losses) + 1))


# ----------------------------------------------------------------------------
if __name__ == "__main__":
    key = jax.random.PRNGKey(0)
    k1, k2, k3, k4 = jax.random.split(key, 4)

    # --- ComposeLoss demo at small module-consistent shapes (default tiling) ---
    N, C = 8, 32
    logits = jax.random.normal(k1, (N, C), dtype=jnp.float32)
    labels = jax.random.randint(k2, (N,), 0, C, dtype=jnp.int32)

    compose = ComposeLoss("1.0*ce")
    loss = compose(logit=logits, label=labels)
    jax.block_until_ready(loss)

    ref = jnp.mean(
        jax.nn.logsumexp(logits, axis=-1)
        - jnp.take_along_axis(logits, labels[:, None], axis=-1)[:, 0]
    )
    assert abs(float(loss) - float(ref)) < 1e-4, (float(loss), float(ref))

    # --- tiled path: ragged rows + ragged class tiles + ignore_index ---
    N2, C2 = 20, 300
    logits2 = jax.random.normal(k3, (N2, C2), dtype=jnp.float32)
    labels2 = jax.random.randint(k4, (N2,), 0, C2, dtype=jnp.int32)
    labels2 = labels2.at[3].set(-100)   # PyTorch default ignore_index
    out2 = cross_entropy_pallas(logits2, labels2, max_tm=8, max_tk=128)
    jax.block_until_ready(out2)

    valid = labels2 >= 0
    per_row_ref = (jax.nn.logsumexp(logits2, axis=-1)
                   - jnp.take_along_axis(logits2,
                                         jnp.maximum(labels2, 0)[:, None],
                                         axis=-1)[:, 0])
    ref2 = jnp.sum(jnp.where(valid, per_row_ref, 0.0)) / jnp.sum(valid)
    assert abs(float(out2) - float(ref2)) < 1e-4, (float(out2), float(ref2))

    # --- bf16 logits path (kernel accumulates in f32) ---
    logits3 = logits2.astype(jnp.bfloat16)
    out3 = cross_entropy_pallas(logits3, labels2, max_tm=16, max_tk=128)
    jax.block_until_ready(out3)
    l3 = logits3.astype(jnp.float32)
    per_row_ref3 = (jax.nn.logsumexp(l3, axis=-1)
                    - jnp.take_along_axis(l3, jnp.maximum(labels2, 0)[:, None],
                                          axis=-1)[:, 0])
    ref3 = jnp.sum(jnp.where(valid, per_row_ref3, 0.0)) / jnp.sum(valid)
    assert abs(float(out3) - float(ref3)) < 1e-3, (float(out3), float(ref3))

    print("KERNEL_OK")
</pallas_src>

<mosaic_0001>
module attributes {stable_mosaic.version = 11 : i64} {
  func.func @kernel(%arg0: i32, %arg1: i32, %arg2: memref<8x1xi32, #tpu.memory_space<vmem>>, %arg3: memref<8x1xf32, #tpu.memory_space<vmem>>, %arg4: memref<8x32xf32, #tpu.memory_space<vmem>>, %arg5: memref<8x128xf32, #tpu.memory_space<vmem>>, %arg6: memref<8x128xf32, #tpu.memory_space<vmem>>, %arg7: memref<8x1xf32, #tpu.memory_space<vmem>>, %arg8: memref<8x1xf32, #tpu.memory_space<vmem>>) attributes {dimension_semantics = [#tpu.dimension_semantics<parallel>, #tpu.dimension_semantics<arbitrary>], iteration_bounds = array<i64: 1, 1>, scalar_prefetch = 0 : i64, scratch_operands = 2 : i64, tpu.core_type = #tpu.core_type<tc>, window_params = [{transform_indices = @transform_0, window_bounds = array<i64: 8, 1>}, {transform_indices = @transform_1, window_bounds = array<i64: 8, 1>}, {transform_indices = @transform_2, window_bounds = array<i64: 8, 32>}, {transform_indices = @transform_3, window_bounds = array<i64: 8, 128>}, {transform_indices = @transform_4, window_bounds = array<i64: 8, 128>}]} {
    %c0_i32 = arith.constant 0 : i32
    %0 = arith.cmpi eq, %arg1, %c0_i32 : i32
    %1 = arith.extui %0 : i1 to i32
    %c0_i32_0 = arith.constant 0 : i32
    %2 = arith.cmpi ne, %1, %c0_i32_0 : i32
    scf.if %2 {
      %cst_13 = arith.constant 0xFF800000 : f32
      %23 = vector.broadcast %cst_13 : f32 to vector<8x1xf32>
      %c0_14 = arith.constant 0 : index
      %c0_15 = arith.constant 0 : index
      %24 = vector.load %arg7[%c0_14, %c0_15] : memref<8x1xf32, #tpu.memory_space<vmem>>, vector<8x1xf32>
      tpu.vector_store %arg7[%c0_14, %c0_15], %23 {strides = array<i32>} : memref<8x1xf32, #tpu.memory_space<vmem>>, vector<8x1xf32>,
      %cst_16 = arith.constant 0.000000e+00 : f32
      %25 = vector.broadcast %cst_16 : f32 to vector<8x1xf32>
      %c0_17 = arith.constant 0 : index
      %c0_18 = arith.constant 0 : index
      %26 = vector.load %arg8[%c0_17, %c0_18] : memref<8x1xf32, #tpu.memory_space<vmem>>, vector<8x1xf32>
      tpu.vector_store %arg8[%c0_17, %c0_18], %25 {strides = array<i32>} : memref<8x1xf32, #tpu.memory_space<vmem>>, vector<8x1xf32>,
    } else {
    }
    %c0 = arith.constant 0 : index
    %c0_1 = arith.constant 0 : index
    %3 = vector.load %arg4[%c0, %c0_1] : memref<8x32xf32, #tpu.memory_space<vmem>>, vector<8x32xf32>
    %c0_2 = arith.constant 0 : index
    %c0_3 = arith.constant 0 : index
    %4 = vector.load %arg7[%c0_2, %c0_3] : memref<8x1xf32, #tpu.memory_space<vmem>>, vector<8x1xf32>
    %cst = arith.constant dense<0xFF800000> : vector<8xf32>
    %5 = vector.multi_reduction <maximumf>, %3, %cst [1] : vector<8x32xf32> to vector<8xf32>
    %6 = vector.shape_cast %5 : vector<8xf32> to vector<8x1xf32>
    %7 = arith.maximumf %4, %6 : vector<8x1xf32>
    %c0_4 = arith.constant 0 : index
    %c0_5 = arith.constant 0 : index
    %8 = vector.load %arg8[%c0_4, %c0_5] : memref<8x1xf32, #tpu.memory_space<vmem>>, vector<8x1xf32>
    %9 = arith.subf %4, %7 : vector<8x1xf32>
    %10 = math.exp %9 : vector<8x1xf32>
    %11 = arith.mulf %8, %10 : vector<8x1xf32>
    %12 = vector.broadcast %7 : vector<8x1xf32> to vector<8x32xf32>
    %13 = arith.subf %3, %12 : vector<8x32xf32>
    %14 = math.exp %13 : vector<8x32xf32>
    %cst_6 = arith.constant dense<0.000000e+00> : vector<8xf32>
    %15 = vector.multi_reduction <add>, %14, %cst_6 [1] : vector<8x32xf32> to vector<8xf32>
    %16 = vector.shape_cast %15 : vector<8xf32> to vector<8x1xf32>
    %17 = arith.addf %11, %16 : vector<8x1xf32>
    %c0_7 = arith.constant 0 : index
    %c0_8 = arith.constant 0 : index
    %18 = vector.load %arg8[%c0_7, %c0_8] : memref<8x1xf32, #tpu.memory_space<vmem>>, vector<8x1xf32>
    tpu.vector_store %arg8[%c0_7, %c0_8], %17 {strides = array<i32>} : memref<8x1xf32, #tpu.memory_space<vmem>>, vector<8x1xf32>,
    %c0_9 = arith.constant 0 : index
    %c0_10 = arith.constant 0 : index
    %19 = vector.load %arg7[%c0_9, %c0_10] : memref<8x1xf32, #tpu.memory_space<vmem>>, vector<8x1xf32>
    tpu.vector_store %arg7[%c0_9, %c0_10], %7 {strides = array<i32>} : memref<8x1xf32, #tpu.memory_space<vmem>>, vector<8x1xf32>,
    %c0_i32_11 = arith.constant 0 : i32
    %20 = arith.cmpi eq, %arg1, %c0_i32_11 : i32
    %21 = arith.extui %20 : i1 to i32
    %c0_i32_12 = arith.constant 0 : i32
    %22 = arith.cmpi ne, %21, %c0_i32_12 : i32
    scf.if %22 {
      %c0_13 = arith.constant 0 : index
      %c0_14 = arith.constant 0 : index
      %23 = vector.load %arg7[%c0_13, %c0_14] : memref<8x1xf32, #tpu.memory_space<vmem>>, vector<8x1xf32>
      %c0_15 = arith.constant 0 : index
      %c0_16 = arith.constant 0 : index
      %24 = vector.load %arg8[%c0_15, %c0_16] : memref<8x1xf32, #tpu.memory_space<vmem>>, vector<8x1xf32>
      %25 = math.log %24 : vector<8x1xf32>
      %26 = arith.addf %23, %25 : vector<8x1xf32>
      %27 = tpu.iota {dimensions = array<i32: 0>} : vector<8x1xi32>
      %c8_i32 = arith.constant 8 : i32
      %28 = arith.muli %arg0, %c8_i32 : i32
      %29 = vector.broadcast %28 : i32 to vector<8x1xi32>
      %30 = arith.addi %27, %29 : vector<8x1xi32>
      %c0_17 = arith.constant 0 : index
      %c0_18 = arith.constant 0 : index
      %31 = vector.load %arg2[%c0_17, %c0_18] : memref<8x1xi32, #tpu.memory_space<vmem>>, vector<8x1xi32>
      %c0_i32_19 = arith.constant 0 : i32
      %32 = vector.broadcast %c0_i32_19 : i32 to vector<8x1xi32>
      %33 = arith.cmpi sge, %31, %32 : vector<8x1xi32>
      %c8_i32_20 = arith.constant 8 : i32
      %34 = vector.broadcast %c8_i32_20 : i32 to vector<8x1xi32>
      %35 = arith.cmpi slt, %30, %34 : vector<8x1xi32>
      %36 = arith.andi %33, %35 : vector<8x1xi1>
      %c0_21 = arith.constant 0 : index
      %c0_22 = arith.constant 0 : index
      %37 = vector.load %arg3[%c0_21, %c0_22] : memref<8x1xf32, #tpu.memory_space<vmem>>, vector<8x1xf32>
      %38 = arith.subf %26, %37 : vector<8x1xf32>
      %cst_23 = arith.constant 0.000000e+00 : f32
      %39 = vector.broadcast %cst_23 : f32 to vector<8x1xf32>
      %40 = arith.select %36, %38, %39 : vector<8x1xi1>, vector<8x1xf32>
      %41 = vector.shape_cast %40 : vector<8x1xf32> to vector<1x8x1xf32>
      %cst_24 = arith.constant dense<0.000000e+00> : vector<1xf32>
      %42 = vector.multi_reduction <add>, %41, %cst_24 [1, 2] : vector<1x8x1xf32> to vector<1xf32>
      %43 = vector.shape_cast %42 : vector<1xf32> to vector<1x1x1xf32>
      %44 = vector.extract %43[0, 0, 0] : f32 from vector<1x1x1xf32>
      %45 = vector.broadcast %44 : f32 to vector<1x1xf32>
      %46 = arith.extui %36 : vector<8x1xi1> to vector<8x1xi32>
      %47 = arith.sitofp %46 : vector<8x1xi32> to vector<8x1xf32>
      %48 = vector.shape_cast %47 : vector<8x1xf32> to vector<1x8x1xf32>
      %cst_25 = arith.constant dense<0.000000e+00> : vector<1xf32>
      %49 = vector.multi_reduction <add>, %48, %cst_25 [1, 2] : vector<1x8x1xf32> to vector<1xf32>
      %50 = vector.shape_cast %49 : vector<1xf32> to vector<1x1x1xf32>
      %51 = vector.extract %50[0, 0, 0] : f32 from vector<1x1x1xf32>
      %52 = vector.broadcast %51 : f32 to vector<1x1xf32>
      %53 = vector.shape_cast %45 : vector<1x1xf32> to vector<1x1xf32>
      %54 = vector.broadcast %53 : vector<1x1xf32> to vector<8x128xf32>
      %c0_26 = arith.constant 0 : index
      %c0_27 = arith.constant 0 : index
      %55 = vector.load %arg5[%c0_26, %c0_27] : memref<8x128xf32, #tpu.memory_space<vmem>>, vector<8x128xf32>
      tpu.vector_store %arg5[%c0_26, %c0_27], %54 {strides = array<i32>} : memref<8x128xf32, #tpu.memory_space<vmem>>, vector<8x128xf32>,
      %56 = vector.shape_cast %52 : vector<1x1xf32> to vector<1x1xf32>
      %57 = vector.broadcast %56 : vector<1x1xf32> to vector<8x128xf32>
      %c0_28 = arith.constant 0 : index
      %c0_29 = arith.constant 0 : index
      %58 = vector.load %arg6[%c0_28, %c0_29] : memref<8x128xf32, #tpu.memory_space<vmem>>, vector<8x128xf32>
      tpu.vector_store %arg6[%c0_28, %c0_29], %57 {strides = array<i32>} : memref<8x128xf32, #tpu.memory_space<vmem>>, vector<8x128xf32>,
    } else {
    }
    return
  }
  func.func @transform_0(%arg0: i32, %arg1: i32) -> (i32, i32) {
    %c0_i32 = arith.constant 0 : i32
    %c0_i32_0 = arith.constant 0 : i32
    return %arg0, %c0_i32 : i32, i32
  }
  func.func @transform_1(%arg0: i32, %arg1: i32) -> (i32, i32) {
    %c0_i32 = arith.constant 0 : i32
    %c0_i32_0 = arith.constant 0 : i32
    return %arg0, %c0_i32 : i32, i32
  }
  func.func @transform_2(%arg0: i32, %arg1: i32) -> (i32, i32) {
    %c0_i32 = arith.constant 0 : i32
    return %arg0, %arg1 : i32, i32
  }
  func.func @transform_3(%arg0: i32, %arg1: i32) -> (i32, i32) {
    %c0_i32 = arith.constant 0 : i32
    %c0_i32_0 = arith.constant 0 : i32
    return %arg0, %c0_i32 : i32, i32
  }
  func.func @transform_4(%arg0: i32, %arg1: i32) -> (i32, i32) {
    %c0_i32 = arith.constant 0 : i32
    %c0_i32_0 = arith.constant 0 : i32
    return %arg0, %c0_i32 : i32, i32
  }
}

</mosaic_0001>

<llo_original>
// kernel: tpu_custom_call.1
$region0: #{tpu_custom_call.1}
  #allocation0 [shape = 'u32[]', space=smem, size = 0x4, offset = 0x4, fixed_abs, tag = 'smem constant byte address 0x4 - core index']
  #allocation1 [shape = 'u32[72,128]{1,0:T(1,128)}', space=vmem, size = 0x9000, scoped, tag = 'internal scratch']
  #allocation2 [shape = 'f32[8,1]{1,0:T(8,128)}', space=vmem, size = 0x1000, scoped, tag = 'scratch operand']
  #allocation3 [shape = 'f32[8,1]{1,0:T(8,128)}', space=vmem, size = 0x1000, scoped, tag = 'scratch operand']
  %s0 = inlined_call_operand.vmem [shape: s32[8,1], index: 0, kind: input, shape index: {}]
  %s1 = inlined_call_operand.vmem [shape: f32[8,1], index: 1, kind: input, shape index: {}]
  %s2 = inlined_call_operand.vmem [shape: f32[8,32], index: 2, kind: input, shape index: {}]
  %s3 = inlined_call_operand.hbm [shape: f32[8,128], index: 3, kind: output, shape index: {0}]
  %s4 = inlined_call_operand.hbm [shape: f32[8,128], index: 4, kind: output, shape index: {1}]
  %5 = xla_tuple %s3, %s4
  %s6 = sld [smem:[#allocation0]]
  $region38: #{tpu_custom_call.1} parent=0
    _
  %s8 = ssub.s32 1, %s6
  %s9 = scalar_select 0, %s8, %s6
  $region1: #{tpu_custom_call.1} parent=0
    #allocation4 [shape = 'u8[4096]{0}', space=vmem, size = 0x1000, scoped, tag = 'output window, operand 0, single buffered']
    #allocation5 [shape = 's32[1]{0}', space=sflag, size = 0x4, scoped, tag = 'scoped memory for tpu_custom_call.1']
    #allocation6 [shape = 'u8[4096]{0}', space=vmem, size = 0x1000, scoped, tag = 'output window, operand 1, single buffered']
    #allocation7 [shape = 's32[1]{0}', space=sflag, size = 0x4, scoped, tag = 'scoped memory for tpu_custom_call.1']
    %10 = vsyncpa [#allocation5], 0
    %11 = vsyncpa [#allocation7], 0
    // Predicated region
    $region2: #{tpu_custom_call.1} parent=1 // pred_check
      _
    $region3: #{tpu_custom_call.1} parent=1 // pred_check_branch
      %13 = sbr.rel (0) target = $region5
    $region4: #{tpu_custom_call.1} parent=1 // pred_region
      _
    $region5: #{tpu_custom_call.1} parent=1 // pred_fallthru
      _
    // Predicated region
    $region6: #{tpu_custom_call.1} parent=1 // pred_check
      _
    $region7: #{tpu_custom_call.1} parent=1 // pred_check_branch
      %15 = sbr.rel (0) target = $region9
    $region8: #{tpu_custom_call.1} parent=1 // pred_region
      _
    $region9: #{tpu_custom_call.1} parent=1 // pred_fallthru
      _
    // Predicated region
    $region10: #{tpu_custom_call.1} parent=1 // pred_check
      _
    $region11: #{tpu_custom_call.1} parent=1 // pred_check_branch
      %17 = sbr.rel (0) target = $region13
    $region12: #{tpu_custom_call.1} parent=1 // pred_region
      _
    $region13: #{tpu_custom_call.1} parent=1 // pred_fallthru
      _
    %p18 = scmp.eq.s32.totalorder 0, 0
    // Predicated region
    $region14: #{tpu_custom_call.1} parent=1 // pred_check
      %p19 = pneg %p18
    $region15: #{tpu_custom_call.1} parent=1 // pred_check_branch
      %21 = sbr.rel (%p19) target = $region17
    $region16: #{tpu_custom_call.1} parent=1 // pred_region
      %vm22 = vcmask 7168
      %23 = vst.msk [vmem:[#allocation2] sm:$0xff] %vm22, -inf
      %24 = vst.msk [vmem:[#allocation3] sm:$0xff] %vm22, 0.0
    $region17: #{tpu_custom_call.1} parent=1 // pred_fallthru
      _
    %v25 = vld [vmem:[%s2] sm:$0xff]
    %v26 = vld [vmem:[#allocation2] sm:$0xff]
    %vm27 = vcmask 261120
    %v28 = vsel %vm27, %v25, -inf
    %29 = vmax.xlane.f32.xlu0 %v28
    %v30 = vpop.xlane.xlu0 %29
    %v31 = vmax.f32 %v26, %v30
    %v32 = vld [vmem:[#allocation3] sm:$0xff]
    %v33 = vsub.f32 %v26, %v31
    %v34 = vmul.f32 %v33, 1.442695
    %v35 = vpow.pop %v34
    %v36 = vmul.f32 %v32, %v35
    %38 = vset.pattern.permute.xlu0 0
    %39 = vperm.xlu0 %38, %v31
    %v40 = vpop.permute.xlu0 %39
    %v42 = vsub.f32 %v25, %v40
    %v43 = vmul.f32 %v42, 1.442695
    %v44 = vpow.pop %v43
    %v45 = vsel %vm27, %v44, 0.0
    %46 = vadd.xlane.f32.xlu0 %v45
    %v47 = vpop.xlane.xlu0 %46
    %v48 = vadd.f32 %v36, %v47
    %vm49 = vcmask 7168
    %50 = vst.msk [vmem:[#allocation3] sm:$0xff] %vm49, %v48
    %51 = vst.msk [vmem:[#allocation2] sm:$0xff] %vm49, %v31
    // Predicated region
    $region18: #{tpu_custom_call.1} parent=1 // pred_check
      %p52 = pneg %p18
    $region19: #{tpu_custom_call.1} parent=1 // pred_check_branch
      %54 = sbr.rel (%p52) target = $region21
    $region20: #{tpu_custom_call.1} parent=1 // pred_region
      %v55 = vld [vmem:[#allocation2] sm:$0xff]
      %v56 = vld [vmem:[#allocation3] sm:$0xff]
      %v57 = vlog2.pop %v56
      %v58 = vmul.f32 %v57, 0.6931472
      %v59 = vadd.f32 %v55, %v58
      %v60 = vlaneseq
      %v61 = vshrl.u32 %v60, 7
      %s62 = smul.u32 0, 8
      %v63 = vstv %s62
      %v64 = vadd.s32 %v61, %v63
      %v65 = vld [vmem:[%s0] sm:$0xff]
      %vm66 = vcmp.ge.s32.totalorder %v65, 0
      %vm67 = vcmp.lt.s32.totalorder %v64, 8
      %vm68 = vmand %vm66, %vm67
      %v69 = vld [vmem:[%s1] sm:$0xff]
      %v70 = vsub.f32 %v59, %v69
      %v71 = vsel %vm68, %v70, 0.0
      %v72 = vsel %vm49, %v71, 0.0
      %73 = vadd.xlane.f32.xlu0 %v72
      %v74 = vpop.xlane.xlu0 %73
      %v75 = vrot.slane %v74, 4
      %v76 = vadd.f32 %v74, %v75
      %v77 = vrot.slane %v76, 2
      %v78 = vadd.f32 %v76, %v77
      %v79 = vrot.slane %v78, 1
      %v80 = vadd.f32 %v78, %v79
      %s81 = vtos %v80
      %v82 = vsel %vm68, 1, 0
      %v83 = vcvt.s32.f32 %v82
      %v84 = vsel %vm49, %v83, 0.0
      %85 = vadd.xlane.f32.xlu0 %v84
      %v86 = vpop.xlane.xlu0 %85
      %v87 = vrot.slane %v86, 4
      %v88 = vadd.f32 %v86, %v87
      %v89 = vrot.slane %v88, 2
      %v90 = vadd.f32 %v88, %v89
      %v91 = vrot.slane %v90, 1
      %v92 = vadd.f32 %v90, %v91
      %s93 = vtos %v92
      %v94 = vstv %s81
      %95 = vst [vmem:[#allocation4] sm:$0xff] %v94
      %v96 = vstv %s93
      %97 = vst [vmem:[#allocation6] sm:$0xff] %v96
    $region21: #{tpu_custom_call.1} parent=1 // pred_fallthru
      _
    // Predicated region
    $region22: #{tpu_custom_call.1} parent=1 // pred_check
      _
    $region23: #{tpu_custom_call.1} parent=1 // pred_check_branch
      %99 = sbr.rel (0) target = $region25
    $region24: #{tpu_custom_call.1} parent=1 // pred_region
      %101 = vsyncadd [#allocation5], 0
      %s103 = sshll.u32 [#allocation4], 4
      %s104 = int_to_ptr.vmem [resolvable:$true] %s103
      %s105 = sshll.u32 %s3, 4
      %s106 = int_to_ptr.hbm [resolvable:$true] %s105
      %108 = dma.vmem_to_hbm [thread:$0]  %s104, 128, %s106, [#allocation5]
    $region25: #{tpu_custom_call.1} parent=1 // pred_fallthru
      _
    // Predicated region
    $region26: #{tpu_custom_call.1} parent=1 // pred_check
      _
    $region27: #{tpu_custom_call.1} parent=1 // pred_check_branch
      %110 = sbr.rel (0) target = $region29
    $region28: #{tpu_custom_call.1} parent=1 // pred_region
      %112 = vsyncadd [#allocation7], 0
      %s114 = sshll.u32 [#allocation6], 4
      %s115 = int_to_ptr.vmem [resolvable:$true] %s114
      %s116 = sshll.u32 %s4, 4
      %s117 = int_to_ptr.hbm [resolvable:$true] %s116
      %119 = dma.vmem_to_hbm [thread:$0]  %s115, 128, %s117, [#allocation7]
    $region29: #{tpu_custom_call.1} parent=1 // pred_fallthru
      _
    // Predicated region
    $region30: #{tpu_custom_call.1} parent=1 // pred_check
      _
    $region31: #{tpu_custom_call.1} parent=1 // pred_check_branch
      %121 = sbr.rel (0) target = $region33
    $region32: #{tpu_custom_call.1} parent=1 // pred_region
      %123 = dma.done [#allocation5], 128
    $region33: #{tpu_custom_call.1} parent=1 // pred_fallthru
      _
    // Predicated region
    $region34: #{tpu_custom_call.1} parent=1 // pred_check
      _
    $region35: #{tpu_custom_call.1} parent=1 // pred_check_branch
      %125 = sbr.rel (0) target = $region37
    $region36: #{tpu_custom_call.1} parent=1 // pred_region
      %127 = dma.done [#allocation7], 128
    $region37: #{tpu_custom_call.1} parent=1 // pred_fallthru
      _
    %128 = vsyncpa [#allocation5], 1
    %129 = vsyncpa [#allocation7], 1

</llo_original>
